<compile_context>
chip_gen: v5e
topology: v5e:2x2
jax: 0.10.0
libtpu: 0.0.40
codegen_flags: <defaults>
</compile_context>

<pallas_src>
import functools

import jax
import jax.numpy as jnp
from jax.experimental import pallas as pl
from jax.experimental.pallas import tpu as pltpu

EPS = 1e-8
LANES = 128
MAX_BLOCK_BYTES = 2 * 1024 * 1024  # ~2 MiB x block per grid step


def _round_up(n, m):
    return ((n + m - 1) // m) * m


def _choose_tile(rows_padded, sub, max_tm):
    """Rows per block: multiple of `sub`, <= max_tm, and an even number of
    grid steps (>= 2) whenever there is more than one sublane tile of work."""
    if rows_padded <= sub:
        return rows_padded
    steps = max(2, -(-rows_padded // max_tm))
    steps += steps % 2  # even step count -> both v7x TensorCores stay busy
    return min(rows_padded, _round_up(-(-rows_padded // steps), sub))


def _poly_exp_log_kernel(params_ref, x_ref, o_ref, *, max_degree):
    # params_ref (SMEM, f32[max_degree + 5]):
    #   [0:D]  poly_coeffs
    #   [D]    bias
    #   [D+1]  log_offset  (= exp(log_logb) + EPS, precomputed in the wrapper)
    #   [D+2]  log_a
    #   [D+3]  exp_w
    #   [D+4]  exp_a
    D = max_degree
    x = x_ref[...].astype(jnp.float32)  # math in f32 (safe on v5e, exact for f32 I/O)

    # Horner: sum_{i=1..D} c_{i-1} x^i + bias = x*(c0 + x*(c1 + ... x*c_{D-1})) + bias
    acc = params_ref[D - 1]
    for i in range(D - 2, -1, -1):
        acc = acc * x + params_ref[i]
    poly = acc * x + params_ref[D]  # + bias

    log_offset = params_ref[D + 1]
    log_a = params_ref[D + 2]
    exp_w = params_ref[D + 3]
    exp_a = params_ref[D + 4]

    out = poly + exp_a * jnp.exp(exp_w * x) + log_a * jnp.log(x + log_offset)
    o_ref[...] = out.astype(o_ref.dtype)


def poly_with_exp_log(x, params, *, max_degree):
    """Elementwise PolyWithExpLog forward.

    x: arbitrary-shape f32/bf16 array.
    params: f32[max_degree + 5] = [coeffs..., bias, log_offset, log_a, exp_w, exp_a].
    """
    assert max_degree >= 1, "need at least one polynomial coefficient"
    orig_shape = x.shape
    dtype = x.dtype
    total = x.size

    itemsize = jnp.dtype(dtype).itemsize
    sub = 8 * max(1, 4 // itemsize)              # sublane pack: 8 (f32), 16 (bf16)
    max_tm = max(sub, MAX_BLOCK_BYTES // (LANES * itemsize))

    # Lane-dense 2D slab; pad rows only up to the sublane packing (<= sub-1 rows).
    rows = -(-total // LANES)
    rows_padded = _round_up(rows, sub)
    padded_total = rows_padded * LANES

    x_flat = x.reshape(-1)
    needs_pad = padded_total != total
    if needs_pad:
        # Pad with 1.0 (safe for log/exp); padded region is sliced off below.
        x_flat = jnp.pad(x_flat, (0, padded_total - total), constant_values=1.0)
    x2d = x_flat.reshape(rows_padded, LANES)

    tm = _choose_tile(rows_padded, sub, max_tm)
    grid = -(-rows_padded // tm)                 # partial last block allowed

    out2d = pl.pallas_call(
        functools.partial(_poly_exp_log_kernel, max_degree=max_degree),
        out_shape=jax.ShapeDtypeStruct((rows_padded, LANES), dtype),
        grid=(grid,),
        in_specs=[
            pl.BlockSpec(memory_space=pltpu.MemorySpace.SMEM),  # scalar params
            pl.BlockSpec((tm, LANES), lambda i: (i, 0)),
        ],
        out_specs=pl.BlockSpec((tm, LANES), lambda i: (i, 0)),
        compiler_params=pltpu.CompilerParams(
            dimension_semantics=("parallel",)
        ),
    )(params, x2d)

    out = out2d.reshape(-1)
    if needs_pad:
        out = out[:total]
    return out.reshape(orig_shape)


def pack_params(poly_coeffs, bias, log_logb, log_a, exp_w, exp_a):
    """Build the SMEM parameter vector; precomputes exp(log_logb) + EPS."""
    log_offset = jnp.exp(log_logb) + EPS
    return jnp.concatenate(
        [
            poly_coeffs.reshape(-1),
            bias.reshape(-1),
            log_offset.reshape(-1),
            log_a.reshape(-1),
            exp_w.reshape(-1),
            exp_a.reshape(-1),
        ]
    ).astype(jnp.float32)


def reference(x, coeffs, bias, log_logb, log_a, exp_w, exp_a):
    # Pure-JAX mirror of the PyTorch forward (stack powers + matmul).
    powers = jnp.stack([x ** i for i in range(1, coeffs.shape[0] + 1)], axis=-1)
    poly = jnp.matmul(powers, coeffs[:, None])[..., 0] + bias
    return (
        poly
        + exp_a * jnp.exp(exp_w * x)
        + log_a * jnp.log(x + jnp.exp(log_logb) + EPS)
    )


if __name__ == "__main__":
    max_degree = 3

    key = jax.random.PRNGKey(0)
    k_c, k_b, k_lb, k_la, k_ew, k_ea, k_x = jax.random.split(key, 7)

    # Deterministic parameter init matching the module's __init__ shapes/scales.
    poly_coeffs = jnp.abs(jax.random.normal(k_c, (max_degree,)) * 1e-4)
    bias = jax.random.normal(k_b, (1,))
    log_logb = jnp.abs(jax.random.normal(k_lb, (1,)) * 1e-4)
    log_a = jnp.abs(jax.random.normal(k_la, (1,)) * 1e-4)
    exp_w = jnp.abs(jax.random.normal(k_ew, (1,)) * 1e-4)
    exp_a = jnp.abs(jax.random.normal(k_ea, (1,)) * 1e-4)

    params = pack_params(poly_coeffs, bias, log_logb, log_a, exp_w, exp_a)

    def ref(xv):
        return reference(
            xv, poly_coeffs, bias[0], log_logb[0], log_a[0], exp_w[0], exp_a[0]
        )

    # 1) Example input: NCHW-like (2, 4, 16, 16), positive values (rotor speeds).
    #    Slab-aligned (2048 elems) -> no pad / no slice, grid of 2 steps.
    x = jax.random.uniform(
        k_x, (2, 4, 16, 16), dtype=jnp.float32, minval=0.1, maxval=10.0
    )
    out = jax.block_until_ready(poly_with_exp_log(x, params, max_degree=max_degree))
    assert out.shape == x.shape and out.dtype == x.dtype
    assert jnp.allclose(out, ref(x), rtol=1e-5, atol=1e-5), "mismatch vs reference"

    # 2) Larger ragged shape: exercises the padded, multi-step path.
    k_x2, k_x3 = jax.random.split(k_x)
    x_big = jax.random.uniform(
        k_x2, (3, 5, 37, 129), dtype=jnp.float32, minval=0.1, maxval=10.0
    )
    out_big = jax.block_until_ready(
        poly_with_exp_log(x_big, params, max_degree=max_degree)
    )
    assert jnp.allclose(out_big, ref(x_big), rtol=1e-5, atol=1e-5), "mismatch (big)"

    # 3) Shape that forces a partial last block (rows=24, tile=16 -> 8-row tail).
    x_part = jax.random.uniform(
        k_x3, (3, 1000), dtype=jnp.float32, minval=0.1, maxval=10.0
    )
    out_part = jax.block_until_ready(
        poly_with_exp_log(x_part, params, max_degree=max_degree)
    )
    assert jnp.allclose(out_part, ref(x_part), rtol=1e-5, atol=1e-5), "mismatch (partial)"

    # 4) bf16 I/O path (compute stays f32 in-kernel); loose tolerance for the
    #    single bf16 rounding at the store.
    x_bf = x_big.astype(jnp.bfloat16)
    out_bf = jax.block_until_ready(
        poly_with_exp_log(x_bf, params, max_degree=max_degree)
    )
    assert out_bf.dtype == jnp.bfloat16 and out_bf.shape == x_bf.shape
    ref_bf = ref(x_bf.astype(jnp.float32))
    assert jnp.allclose(
        out_bf.astype(jnp.float32), ref_bf, rtol=2e-2, atol=2e-2
    ), "mismatch (bf16)"

    print("KERNEL_OK")
</pallas_src>

<mosaic_0001>
module attributes {stable_mosaic.version = 11 : i64} {
  func.func @_poly_exp_log_kernel(%arg0: i32, %arg1: memref<8xf32, #tpu.memory_space<smem>>, %arg2: memref<8x128xf32, #tpu.memory_space<vmem>>, %arg3: memref<8x128xf32, #tpu.memory_space<vmem>>) attributes {dimension_semantics = [#tpu.dimension_semantics<parallel>], iteration_bounds = array<i64: 2>, scalar_prefetch = 0 : i64, scratch_operands = 0 : i64, tpu.core_type = #tpu.core_type<tc>, window_params = [{transform_indices = @transform_0, window_bounds = array<i64: 8>}, {transform_indices = @transform_1, window_bounds = array<i64: 8, 128>}, {transform_indices = @transform_2, window_bounds = array<i64: 8, 128>}]} {
    %c0 = arith.constant 0 : index
    %c0_0 = arith.constant 0 : index
    %0 = vector.load %arg2[%c0, %c0_0] : memref<8x128xf32, #tpu.memory_space<vmem>>, vector<8x128xf32>
    %c2 = arith.constant 2 : index
    %1 = memref.load %arg1[%c2] : memref<8xf32, #tpu.memory_space<smem>>
    %2 = vector.broadcast %1 : f32 to vector<8x128xf32>
    %3 = arith.mulf %2, %0 : vector<8x128xf32>
    %c1 = arith.constant 1 : index
    %4 = memref.load %arg1[%c1] : memref<8xf32, #tpu.memory_space<smem>>
    %5 = vector.broadcast %4 : f32 to vector<8x128xf32>
    %6 = arith.addf %3, %5 : vector<8x128xf32>
    %7 = arith.mulf %6, %0 : vector<8x128xf32>
    %c0_1 = arith.constant 0 : index
    %8 = memref.load %arg1[%c0_1] : memref<8xf32, #tpu.memory_space<smem>>
    %9 = vector.broadcast %8 : f32 to vector<8x128xf32>
    %10 = arith.addf %7, %9 : vector<8x128xf32>
    %11 = arith.mulf %10, %0 : vector<8x128xf32>
    %c3 = arith.constant 3 : index
    %12 = memref.load %arg1[%c3] : memref<8xf32, #tpu.memory_space<smem>>
    %13 = vector.broadcast %12 : f32 to vector<8x128xf32>
    %14 = arith.addf %11, %13 : vector<8x128xf32>
    %c4 = arith.constant 4 : index
    %15 = memref.load %arg1[%c4] : memref<8xf32, #tpu.memory_space<smem>>
    %c5 = arith.constant 5 : index
    %16 = memref.load %arg1[%c5] : memref<8xf32, #tpu.memory_space<smem>>
    %c6 = arith.constant 6 : index
    %17 = memref.load %arg1[%c6] : memref<8xf32, #tpu.memory_space<smem>>
    %c7 = arith.constant 7 : index
    %18 = memref.load %arg1[%c7] : memref<8xf32, #tpu.memory_space<smem>>
    %19 = vector.broadcast %17 : f32 to vector<8x128xf32>
    %20 = arith.mulf %19, %0 : vector<8x128xf32>
    %21 = math.exp %20 : vector<8x128xf32>
    %22 = vector.broadcast %18 : f32 to vector<8x128xf32>
    %23 = arith.mulf %22, %21 : vector<8x128xf32>
    %24 = arith.addf %14, %23 : vector<8x128xf32>
    %25 = vector.broadcast %15 : f32 to vector<8x128xf32>
    %26 = arith.addf %0, %25 : vector<8x128xf32>
    %27 = math.log %26 : vector<8x128xf32>
    %28 = vector.broadcast %16 : f32 to vector<8x128xf32>
    %29 = arith.mulf %28, %27 : vector<8x128xf32>
    %30 = arith.addf %24, %29 : vector<8x128xf32>
    %c0_2 = arith.constant 0 : index
    %c0_3 = arith.constant 0 : index
    %31 = vector.load %arg3[%c0_2, %c0_3] : memref<8x128xf32, #tpu.memory_space<vmem>>, vector<8x128xf32>
    tpu.vector_store %arg3[%c0_2, %c0_3], %30 {strides = array<i32>} : memref<8x128xf32, #tpu.memory_space<vmem>>, vector<8x128xf32>,
    return
  }
  func.func @transform_0(%arg0: i32) -> i32 {
    %c0_i32 = arith.constant 0 : i32
    %c0_i32_0 = arith.constant 0 : i32
    return %c0_i32 : i32
  }
  func.func @transform_1(%arg0: i32) -> (i32, i32) {
    %c0_i32 = arith.constant 0 : i32
    %c0_i32_0 = arith.constant 0 : i32
    return %arg0, %c0_i32 : i32, i32
  }
  func.func @transform_2(%arg0: i32) -> (i32, i32) {
    %c0_i32 = arith.constant 0 : i32
    %c0_i32_0 = arith.constant 0 : i32
    return %arg0, %c0_i32 : i32, i32
  }
}

</mosaic_0001>

<llo_original>
// kernel: tpu_custom_call.1
$region0: #{tpu_custom_call.1}
  #allocation0 [shape = 'u32[]', space=smem, size = 0x4, offset = 0x4, fixed_abs, tag = 'smem constant byte address 0x4 - core index']
  #allocation1 [shape = 'u32[72,128]{1,0:T(1,128)}', space=vmem, size = 0x9000, scoped, tag = 'internal scratch']
  %s0 = inlined_call_operand.hbm [shape: f32[8], index: 0, kind: input, shape index: {}]
  %s1 = inlined_call_operand.hbm [shape: f32[16,128], index: 1, kind: input, shape index: {}]
  %s2 = inlined_call_operand.hbm [shape: f32[16,128], index: 2, kind: output, shape index: {}]
  %s3 = sld [smem:[#allocation0]]
  $region49: #{tpu_custom_call.1} parent=0
    _
  %s5 = ssub.s32 1, %s3
  %s6 = scalar_select 0, %s5, %s3
  $region1: #{tpu_custom_call.1} parent=0
    #allocation2 [shape = 'u8[512]{0}', space=smem, size = 0x200, scoped, tag = 'input window, operand 0, single buffered']
    #allocation3 [shape = 's32[2]{0}', space=sflag, size = 0x8, scoped, tag = 'scoped memory for tpu_custom_call.1']
    #allocation4 [shape = 's32[2]{0}', space=sflag, size = 0x8, scoped, tag = 'scoped memory for tpu_custom_call.1']
    #allocation5 [shape = 's32[2]{0}', space=sflag, size = 0x8, scoped, tag = 'scoped memory for tpu_custom_call.1']
    #allocation6 [shape = 'u8[8192]{0}', space=vmem, size = 0x2000, scoped, tag = 'input window, operand 1']
    #allocation7 [shape = 'u8[8192]{0}', space=vmem, size = 0x2000, scoped, tag = 'output window, operand 0']
    %7 = vsyncpa [#allocation5], 0
    %8 = vsyncpa [#allocation3], 0
    %s9 = scalar_lea.sflag [#allocation3], 1
    %10 = vsyncpa %s9, 0
    %11 = vsyncpa [#allocation4], 0
    %s12 = scalar_lea.sflag [#allocation4], 1
    %13 = vsyncpa %s12, 0
    loop: start=0, step=1, limit=4
    $region2: #{tpu_custom_call.1} parent=1 // loop_pre_header
      _
    $region3: #{tpu_custom_call.1} parent=1 // loop_header
      %s15 = sphi 0, %s19
      %p16 = scmp.ge.s32.totalorder %s15, 4
      %s23 = sphi 0, %s23
      %s25 = sphi 0, %s23
      %s26 = sphi 0, %s25
      %s40 = sphi 0, %s26
      %s46 = sphi 0, %s48
      %s49 = sphi 0, %s46
      %s50 = sphi 0, %s49
      %s66 = sphi 0, %s50
      %s72 = sphi 0, %s74
      %s75 = sphi 0, %s72
      %s76 = sphi 0, %s75
      %s92 = sphi 0, %s76
    $region4: #{tpu_custom_call.1} parent=1 // loop_header_branch
      %18 = sbr.rel (%p16) target = $region8
    $region5: #{tpu_custom_call.1} parent=1 // loop_body
      %s20 = ssub.s32 %s15, 1
      %s21 = ssub.s32 %s15, 2
      %s22 = sadd.s32 %s15, 1
      %s24 = sadd.s32 %s23, 1
      %p27 = scmp.eq.s32.totalorder %s15, 1
      %p28 = scmp.ne.s32.totalorder %s23, %s25
      %p29 = scmp.eq.s32.totalorder %s15, 0
      %p30 = por %p28, %p29
      %p31 = scmp.ne.s32.totalorder %s23, %s25
      %p32 = scmp.eq.s32.totalorder %s20, 1
      %p33 = por %p31, %p32
      %p34 = scmp.ne.s32.totalorder %s25, %s26
      %p35 = scmp.eq.s32.totalorder %s20, 0
      %p36 = por %p34, %p35
      %p37 = scmp.ne.s32.totalorder %s25, %s26
      %p38 = scmp.eq.s32.totalorder %s21, 1
      %p39 = por %p37, %p38
      %p41 = scmp.ne.s32.totalorder %s26, %s40
      %p42 = scmp.eq.s32.totalorder %s21, 0
      %p43 = por %p41, %p42
      %s44 = ssub.s32 %s15, %s22
      %p45 = scmp.eq.s32.totalorder %s44, 0
      %s47 = sadd.s32 %s46, 1
      %s48 = scalar_select %p45, %s46, %s47
      %p51 = pneg %p45
      %p52 = scmp.eq.s32.totalorder %s15, 1
      %p53 = por %p51, %p52
      %p54 = scmp.ne.s32.totalorder %s46, %s49
      %p55 = scmp.eq.s32.totalorder %s15, 0
      %p56 = por %p54, %p55
      %p57 = scmp.ne.s32.totalorder %s46, %s49
      %p58 = scmp.eq.s32.totalorder %s20, 1
      %p59 = por %p57, %p58
      %p60 = scmp.ne.s32.totalorder %s49, %s50
      %p61 = scmp.eq.s32.totalorder %s20, 0
      %p62 = por %p60, %p61
      %p63 = scmp.ne.s32.totalorder %s49, %s50
      %p64 = scmp.eq.s32.totalorder %s21, 1
      %p65 = por %p63, %p64
      %p67 = scmp.ne.s32.totalorder %s50, %s66
      %p68 = scmp.eq.s32.totalorder %s21, 0
      %p69 = por %p67, %p68
      %s70 = ssub.s32 %s15, %s22
      %p71 = scmp.eq.s32.totalorder %s70, 0
      %s73 = sadd.s32 %s72, 1
      %s74 = scalar_select %p71, %s72, %s73
      %p77 = pneg %p71
      %p78 = scmp.eq.s32.totalorder %s15, 1
      %p79 = por %p77, %p78
      %p80 = scmp.ne.s32.totalorder %s72, %s75
      %p81 = scmp.eq.s32.totalorder %s15, 0
      %p82 = por %p80, %p81
      %p83 = scmp.ne.s32.totalorder %s72, %s75
      %p84 = scmp.eq.s32.totalorder %s20, 1
      %p85 = por %p83, %p84
      %p86 = scmp.ne.s32.totalorder %s75, %s76
      %p87 = scmp.eq.s32.totalorder %s20, 0
      %p88 = por %p86, %p87
      %p89 = scmp.ne.s32.totalorder %s75, %s76
      %p90 = scmp.eq.s32.totalorder %s21, 1
      %p91 = por %p89, %p90
      %p93 = scmp.ne.s32.totalorder %s76, %s92
      %p94 = scmp.eq.s32.totalorder %s21, 0
      %p95 = por %p93, %p94
      %p96 = scmp.le.s32.totalorder 1, %s15
      %p97 = scmp.lt.s32.totalorder %s15, 3
      %p98 = pnand %p96, %p97
      %p99 = pneg %p98
      // Predicated region
      $region9: #{tpu_custom_call.1} parent=5 // pred_check
        _
      $region10: #{tpu_custom_call.1} parent=5 // pred_check_branch
        %101 = sbr.rel (%p98) target = $region12
      $region11: #{tpu_custom_call.1} parent=5 // pred_region
        %s102 = ssub.s32 %s15, 1
        // Predicated region
        $region13: #{tpu_custom_call.1} parent=11 // pred_check
          %p103 = pneg %p36
        $region14: #{tpu_custom_call.1} parent=11 // pred_check_branch
          %105 = sbr.rel (%p103) target = $region16
        $region15: #{tpu_custom_call.1} parent=11 // pred_region
          %107 = vsyncadd [#allocation5], 0
          %s109 = sshll.u32 %s0, 4
          %s110 = int_to_ptr.hbm [resolvable:$true] %s109
          %112 = dma.hbm_to_smem %s110, 16, [#allocation2], [#allocation5]
        $region16: #{tpu_custom_call.1} parent=11 // pred_fallthru
          _
      $region12: #{tpu_custom_call.1} parent=5 // pred_fallthru
        _
      %p113 = scmp.lt.s32.totalorder %s15, 2
      // Predicated region
      $region17: #{tpu_custom_call.1} parent=5 // pred_check
        %p114 = pneg %p113
      $region18: #{tpu_custom_call.1} parent=5 // pred_check_branch
        %116 = sbr.rel (%p114) target = $region20
      $region19: #{tpu_custom_call.1} parent=5 // pred_region
        // Predicated region
        $region21: #{tpu_custom_call.1} parent=19 // pred_check
          %p117 = pneg %p56
        $region22: #{tpu_custom_call.1} parent=19 // pred_check_branch
          %119 = sbr.rel (%p117) target = $region24
        $region23: #{tpu_custom_call.1} parent=19 // pred_region
          %s120 = sand.u32 %s46, 1
          %s121 = scalar_lea.sflag [#allocation3], %s120
          %s122 = sand.u32 %s46, 1
          %s123 = smul.addr %s122, 8
          %s124 = scalar_lea.vmem [#allocation6], %s123
          %126 = vsyncadd %s121, 0
          %s127 = smul.addr %s15, 8
          %s128 = scalar_lea.hbm %s1, %s127
          %s130 = sshll.u32 %s128, 4
          %s131 = int_to_ptr.hbm [resolvable:$true] %s130
          %s132 = sshll.u32 %s124, 4
          %s133 = int_to_ptr.vmem [resolvable:$true] %s132
          %135 = dma.hbm_to_vmem [thread:$0]  %s131, 128, %s133, %s121
        $region24: #{tpu_custom_call.1} parent=19 // pred_fallthru
          _
      $region20: #{tpu_custom_call.1} parent=5 // pred_fallthru
        _
      %p136 = scmp.le.s32.totalorder 1, %s15
      %p137 = scmp.lt.s32.totalorder %s15, 3
      %p138 = pnand %p136, %p137
      %p139 = pneg %p138
      // Predicated region
      $region25: #{tpu_custom_call.1} parent=5 // pred_check
        _
      $region26: #{tpu_custom_call.1} parent=5 // pred_check_branch
        %141 = sbr.rel (%p138) target = $region28
      $region27: #{tpu_custom_call.1} parent=5 // pred_region
        %s142 = ssub.s32 %s15, 1
        // Predicated region
        $region29: #{tpu_custom_call.1} parent=27 // pred_check
          %p143 = pneg %p36
        $region30: #{tpu_custom_call.1} parent=27 // pred_check_branch
          %145 = sbr.rel (%p143) target = $region32
        $region31: #{tpu_custom_call.1} parent=27 // pred_region
          %147 = dma.done [#allocation5], 16
        $region32: #{tpu_custom_call.1} parent=27 // pred_fallthru
          _
        %s148 = sand.u32 %s49, 1
        %s149 = scalar_lea.sflag [#allocation3], %s148
        %s150 = sand.u32 %s49, 1
        %s151 = smul.addr %s150, 8
        %s152 = scalar_lea.vmem [#allocation6], %s151
        // Predicated region
        $region33: #{tpu_custom_call.1} parent=27 // pred_check
          %p153 = pneg %p62
        $region34: #{tpu_custom_call.1} parent=27 // pred_check_branch
          %155 = sbr.rel (%p153) target = $region36
        $region35: #{tpu_custom_call.1} parent=27 // pred_region
          %157 = dma.done %s149, 128
        $region36: #{tpu_custom_call.1} parent=27 // pred_fallthru
          _
        %158 = sfence
        %p159 = pneg %p36
        %p160 = pneg %p33
        %s161 = sand.u32 %s49, 1
        %s162 = scalar_lea.sflag [#allocation3], %s161
        %s163 = sand.u32 %s49, 1
        %s164 = smul.addr %s163, 8
        %s165 = scalar_lea.vmem [#allocation6], %s164
        %p166 = pneg %p62
        %p167 = pneg %p59
        %p168 = pneg %p88
        %p169 = pneg %p85
        %s170 = sand.u32 %s75, 1
        %s171 = scalar_lea.sflag [#allocation4], %s170
        %s172 = sand.u32 %s75, 1
        %s173 = smul.addr %s172, 8
        %s174 = scalar_lea.vmem [#allocation7], %s173
        %v175 = vld [vmem:[%s152] sm:$0xff]
        %s176 = sld [smem:[#allocation2 + $0x2]]
        %v177 = vstv %s176
        %v178 = vmul.f32 %v177, %v175
        %s179 = sld [smem:[#allocation2 + $0x1]]
        %v180 = vstv %s179
        %v181 = vadd.f32 %v178, %v180
        %v182 = vmul.f32 %v181, %v175
        %s183 = sld [smem:[#allocation2]]
        %v184 = vstv %s183
        %v185 = vadd.f32 %v182, %v184
        %v186 = vmul.f32 %v185, %v175
        %s187 = sld [smem:[#allocation2 + $0x3]]
        %v188 = vstv %s187
        %v189 = vadd.f32 %v186, %v188
        %s190 = sld [smem:[#allocation2 + $0x4]]
        %s191 = sld [smem:[#allocation2 + $0x5]]
        %s192 = sld [smem:[#allocation2 + $0x6]]
        %s193 = sld [smem:[#allocation2 + $0x7]]
        %v194 = vstv %s192
        %v195 = vmul.f32 %v194, %v175
        %v196 = vmul.f32 %v195, 1.442695
        %v197 = vpow.pop %v196
        %v198 = vstv %s193
        %v199 = vmul.f32 %v198, %v197
        %v200 = vadd.f32 %v189, %v199
        %v201 = vstv %s190
        %v202 = vadd.f32 %v175, %v201
        %v203 = vlog2.pop %v202
        %v204 = vmul.f32 %v203, 0.6931472
        %v205 = vstv %s191
        %v206 = vmul.f32 %v205, %v204
        %v207 = vadd.f32 %v200, %v206
        %208 = vst [vmem:[%s174] sm:$0xff] %v207
        %s209 = sand.u32 %s75, 1
        %s210 = scalar_lea.sflag [#allocation4], %s209
        %s211 = sand.u32 %s75, 1
        %s212 = smul.addr %s211, 8
        %s213 = scalar_lea.vmem [#allocation7], %s212
        // Predicated region
        $region37: #{tpu_custom_call.1} parent=27 // pred_check
          %p214 = pneg %p85
        $region38: #{tpu_custom_call.1} parent=27 // pred_check_branch
          %216 = sbr.rel (%p214) target = $region40
        $region39: #{tpu_custom_call.1} parent=27 // pred_region
          %218 = vsyncadd %s210, 0
          %s219 = smul.addr %s20, 8
          %s220 = scalar_lea.hbm %s2, %s219
          %s222 = sshll.u32 %s213, 4
          %s223 = int_to_ptr.vmem [resolvable:$true] %s222
          %s224 = sshll.u32 %s220, 4
          %s225 = int_to_ptr.hbm [resolvable:$true] %s224
          %227 = dma.vmem_to_hbm [thread:$0]  %s223, 128, %s225, %s210
        $region40: #{tpu_custom_call.1} parent=27 // pred_fallthru
          _
      $region28: #{tpu_custom_call.1} parent=5 // pred_fallthru
        _
      %p228 = scmp.le.s32.totalorder 2, %s15
      // Predicated region
      $region41: #{tpu_custom_call.1} parent=5 // pred_check
        %p229 = pneg %p228
      $region42: #{tpu_custom_call.1} parent=5 // pred_check_branch
        %231 = sbr.rel (%p229) target = $region44
      $region43: #{tpu_custom_call.1} parent=5 // pred_region
        %s232 = ssub.s32 %s15, 2
        // Predicated region
        $region45: #{tpu_custom_call.1} parent=43 // pred_check
          %p233 = pneg %p91
        $region46: #{tpu_custom_call.1} parent=43 // pred_check_branch
          %235 = sbr.rel (%p233) target = $region48
        $region47: #{tpu_custom_call.1} parent=43 // pred_region
          %s236 = sand.u32 %s76, 1
          %s237 = scalar_lea.sflag [#allocation4], %s236
          %s238 = sand.u32 %s76, 1
          %s239 = smul.addr %s238, 8
          %s240 = scalar_lea.vmem [#allocation7], %s239
          %242 = dma.done %s237, 128
        $region48: #{tpu_custom_call.1} parent=43 // pred_fallthru
          _
      $region44: #{tpu_custom_call.1} parent=5 // pred_fallthru
        _
    $region6: #{tpu_custom_call.1} parent=1 // loop_footer
      %s19 = sadd.s32 1, %s15
    $region7: #{tpu_custom_call.1} parent=1 // loop_footer_branch
      %14 = sbr.rel target = $region3
    $region8: #{tpu_custom_call.1} parent=1 // loop_exit
      _
    %243 = vsyncpa [#allocation3], 1
    %s244 = scalar_lea.sflag [#allocation3], 1
    %245 = vsyncpa %s244, 1
    %246 = vsyncpa [#allocation4], 1
    %s247 = scalar_lea.sflag [#allocation4], 1
    %248 = vsyncpa %s247, 1
    %249 = vsyncpa [#allocation5], 1
    %s250 = scalar_lea.sflag [#allocation5], 1
    %251 = vsyncpa %s250, 1

</llo_original>
